<compile_context>
chip_gen: v7x
topology: tpu7x:2x2x1
jax: 0.10.0
libtpu: 0.0.40
codegen_flags: <defaults>
</compile_context>

<pallas_src>
import functools

import jax
import jax.numpy as jnp
from jax.experimental import pallas as pl
from jax.experimental.pallas import tpu as pltpu

LANES = 128
SUBLANES = 8
MAX_TILE_ROWS = 2048               # 2048 x 128 f32 = 1 MiB per input per buffer
VMEM_LIMIT_BYTES = 32 * 1024 * 1024


def _num_tensorcores() -> int:
    """2 TensorCores per chip on v7x; 1 on v5e/v6e (default safely to 1)."""
    try:
        kind = jax.devices()[0].device_kind.lower()
    except Exception:
        return 1
    return 2 if "v7" in kind else 1


def _bce_kernel(x_ref, y_ref, o_ref, acc_ref, *, num_cores, tiles_per_core,
                tile_rows, n_rows, need_mask):
    if num_cores > 1:
        core, t, t_axis = pl.program_id(0), pl.program_id(1), 1
    else:
        core, t, t_axis = 0, pl.program_id(0), 0

    @pl.when(t == 0)
    def _init():
        acc_ref[...] = jnp.zeros_like(acc_ref)

    x = x_ref[...].astype(jnp.float32)
    y = y_ref[...].astype(jnp.float32)

    # PyTorch BCELoss clamps log terms at -100 to avoid -inf * 0 = nan.
    log_x = jnp.maximum(jnp.log(x), -100.0)
    log_1mx = jnp.maximum(jnp.log(1.0 - x), -100.0)
    # -(y*log_x + (1-y)*log_1mx) == -(log_1mx + y*(log_x - log_1mx))
    loss = -(log_1mx + y * (log_x - log_1mx))

    if need_mask:
        # Row-granularity mask only (all lanes of a valid row are valid since
        # the wrapper passes a lane-dense prefix).  Zeroes the garbage rows of
        # the boundary tile and whole redundant tiles of the core split.
        # Select-based so NaNs from log() on garbage rows never reach the acc.
        rows, lanes = loss.shape
        row_ids = jax.lax.broadcasted_iota(jnp.int32, (rows, lanes), 0)
        block_row0 = (core * tiles_per_core + t) * tile_rows
        loss = jnp.where(block_row0 + row_ids < n_rows, loss, 0.0)

    # Fold the block's rows into the (8, 128) accumulator with a binary tree
    # of sublane-aligned slice-adds (VPU only; no per-step XLU reduce).
    part = loss
    while part.shape[0] > SUBLANES:
        half = part.shape[0] // 2
        part = part[:half, :] + part[half:, :]
    acc_ref[...] += part

    @pl.when(t == pl.num_programs(t_axis) - 1)
    def _finalize():
        # Single cross-lane/sublane reduce in the epilogue; per-core partial.
        o_ref[...] = jnp.sum(acc_ref[...], keepdims=True)


def _bce_partial_sums(x2d, y2d, *, max_tile_rows=MAX_TILE_ROWS):
    """Per-core partial sums of the element-wise BCE over a (rows, 128) slab."""
    n_rows = x2d.shape[0]

    # tile_rows must be SUBLANES * 2**k for the binary-tree row fold.
    tile_rows = min(max_tile_rows,
                    SUBLANES * pl.next_power_of_2(pl.cdiv(n_rows, SUBLANES)))
    total_tiles = pl.cdiv(n_rows, tile_rows)
    num_cores = min(_num_tensorcores(), total_tiles)
    tiles_per_core = pl.cdiv(total_tiles, num_cores)
    last_tile = total_tiles - 1

    # Mask is compiled out entirely when every tile is full and non-redundant.
    need_mask = (n_rows % tile_rows != 0) or (num_cores * tiles_per_core
                                              != total_tiles)

    kernel = functools.partial(
        _bce_kernel, num_cores=num_cores, tiles_per_core=tiles_per_core,
        tile_rows=tile_rows, n_rows=n_rows, need_mask=need_mask)

    n_main = n_rows * LANES
    cost = pl.CostEstimate(flops=10 * n_main, transcendentals=2 * n_main,
                           bytes_accessed=8 * n_main)

    if num_cores > 1:
        grid = (num_cores, tiles_per_core)

        def in_map(c, t):
            # Clamp so redundant tiles of the split never index past the
            # array; their contribution is zeroed by the in-kernel mask.
            return (jnp.minimum(c * tiles_per_core + t, last_tile), 0)

        out_map = lambda c, t: (c, 0)
        dim_sem = (getattr(pltpu, "CORE_PARALLEL", "parallel"),
                   getattr(pltpu, "ARBITRARY", "arbitrary"))
    else:
        grid = (total_tiles,)
        in_map = lambda t: (t, 0)
        out_map = lambda t: (0, 0)
        dim_sem = ("arbitrary",)

    return pl.pallas_call(
        kernel,
        out_shape=jax.ShapeDtypeStruct((num_cores, 1), jnp.float32),
        grid=grid,
        in_specs=[pl.BlockSpec((tile_rows, LANES), in_map),
                  pl.BlockSpec((tile_rows, LANES), in_map)],
        out_specs=pl.BlockSpec((1, 1), out_map),
        scratch_shapes=[pltpu.VMEM((SUBLANES, LANES), jnp.float32)],
        compiler_params=pltpu.CompilerParams(
            dimension_semantics=dim_sem,
            vmem_limit_bytes=VMEM_LIMIT_BYTES),
        cost_estimate=cost,
    )(x2d, y2d)


def bce_loss(x, y):
    """Mean binary cross-entropy, semantics of nn.BCELoss()(x, y)."""
    assert x.shape == y.shape
    n_valid = int(x.size)

    x_flat = jnp.ravel(x)
    y_flat = jnp.ravel(y)

    n_rows = n_valid // LANES
    n_main = n_rows * LANES

    total = jnp.float32(0.0)

    # <128-element lane remainder: trivial plain-JAX fold (no full-array pad).
    if n_main < n_valid:
        xt = x_flat[n_main:].astype(jnp.float32)
        yt = y_flat[n_main:].astype(jnp.float32)
        lt_x = jnp.maximum(jnp.log(xt), -100.0)
        lt_1mx = jnp.maximum(jnp.log(1.0 - xt), -100.0)
        total = total + jnp.sum(-(lt_1mx + yt * (lt_x - lt_1mx)))

    if n_rows > 0:
        # Prefix slice + reshape is a zero-copy, lane-dense view.
        x2d = x_flat[:n_main].reshape(n_rows, LANES)
        y2d = y_flat[:n_main].reshape(n_rows, LANES)
        partials = _bce_partial_sums(x2d, y2d)
        total = total + jnp.sum(partials)

    return total / n_valid


if __name__ == "__main__":
    key = jax.random.PRNGKey(0)
    kx, ky = jax.random.split(key)

    # x: model output (probabilities in (0,1)), y: targets in [0,1]
    shape = (2, 4, 16, 16)  # NCHW
    x = jax.nn.sigmoid(jax.random.normal(kx, shape, dtype=jnp.float32))
    y = (jax.random.uniform(ky, shape, dtype=jnp.float32) > 0.5).astype(
        jnp.float32
    )

    loss = bce_loss(x, y)
    jax.block_until_ready(loss)

    # reference check in plain JAX (same clamp semantics as nn.BCELoss)
    ref = jnp.mean(
        -(y * jnp.maximum(jnp.log(x), -100.0)
          + (1.0 - y) * jnp.maximum(jnp.log(1.0 - x), -100.0))
    )
    assert jnp.allclose(loss, ref, atol=1e-5, rtol=1e-5), (loss, ref)

    print("KERNEL_OK")
</pallas_src>

<mosaic_0001>
module attributes {stable_mosaic.version = 11 : i64} {
  func.func @_bce_kernel(%arg0: i32, %arg1: memref<16x128xf32, #tpu.memory_space<vmem>>, %arg2: memref<16x128xf32, #tpu.memory_space<vmem>>, %arg3: memref<1x1xf32, #tpu.memory_space<vmem>>, %arg4: memref<8x128xf32, #tpu.memory_space<vmem>>) attributes {dimension_semantics = [#tpu.dimension_semantics<arbitrary>], iteration_bounds = array<i64: 1>, scalar_prefetch = 0 : i64, scratch_operands = 1 : i64, tpu.core_type = #tpu.core_type<tc>, window_params = [{transform_indices = @transform_0, window_bounds = array<i64: 16, 128>}, {transform_indices = @transform_1, window_bounds = array<i64: 16, 128>}, {pipeline_mode = #tpu.pipeline_mode<synchronous>, transform_indices = @transform_2, window_bounds = array<i64: 1, 1>}]} {
    %c0_i32 = arith.constant 0 : i32
    %0 = arith.cmpi eq, %arg0, %c0_i32 : i32
    %1 = arith.extui %0 : i1 to i32
    %c0_i32_0 = arith.constant 0 : i32
    %2 = arith.cmpi ne, %1, %c0_i32_0 : i32
    scf.if %2 {
      %cst_13 = arith.constant 0.000000e+00 : f32
      %27 = vector.broadcast %cst_13 : f32 to vector<8x128xf32>
      %c0_14 = arith.constant 0 : index
      %c0_15 = arith.constant 0 : index
      %28 = vector.load %arg4[%c0_14, %c0_15] : memref<8x128xf32, #tpu.memory_space<vmem>>, vector<8x128xf32>
      tpu.vector_store %arg4[%c0_14, %c0_15], %27 {strides = array<i32>} : memref<8x128xf32, #tpu.memory_space<vmem>>, vector<8x128xf32>,
    } else {
    }
    %c0 = arith.constant 0 : index
    %c0_1 = arith.constant 0 : index
    %3 = vector.load %arg1[%c0, %c0_1] : memref<16x128xf32, #tpu.memory_space<vmem>>, vector<16x128xf32>
    %c0_2 = arith.constant 0 : index
    %c0_3 = arith.constant 0 : index
    %4 = vector.load %arg2[%c0_2, %c0_3] : memref<16x128xf32, #tpu.memory_space<vmem>>, vector<16x128xf32>
    %5 = math.log %3 : vector<16x128xf32>
    %cst = arith.constant -1.000000e+02 : f32
    %6 = vector.broadcast %cst : f32 to vector<16x128xf32>
    %7 = arith.maximumf %5, %6 : vector<16x128xf32>
    %cst_4 = arith.constant 1.000000e+00 : f32
    %8 = vector.broadcast %cst_4 : f32 to vector<16x128xf32>
    %9 = arith.subf %8, %3 : vector<16x128xf32>
    %10 = math.log %9 : vector<16x128xf32>
    %cst_5 = arith.constant -1.000000e+02 : f32
    %11 = vector.broadcast %cst_5 : f32 to vector<16x128xf32>
    %12 = arith.maximumf %10, %11 : vector<16x128xf32>
    %13 = arith.subf %7, %12 : vector<16x128xf32>
    %14 = arith.mulf %4, %13 : vector<16x128xf32>
    %15 = arith.addf %12, %14 : vector<16x128xf32>
    %cst_6 = arith.constant 0.000000e+00 : f32
    %16 = vector.broadcast %cst_6 : f32 to vector<16x128xf32>
    %17 = arith.subf %16, %15 : vector<16x128xf32>
    %18 = vector.extract_strided_slice %17 {offsets = [0, 0], sizes = [8, 128], strides = [1, 1]} : vector<16x128xf32> to vector<8x128xf32>
    %19 = vector.extract_strided_slice %17 {offsets = [8, 0], sizes = [8, 128], strides = [1, 1]} : vector<16x128xf32> to vector<8x128xf32>
    %20 = arith.addf %18, %19 : vector<8x128xf32>
    %c0_7 = arith.constant 0 : index
    %c0_8 = arith.constant 0 : index
    %21 = vector.load %arg4[%c0_7, %c0_8] : memref<8x128xf32, #tpu.memory_space<vmem>>, vector<8x128xf32>
    %22 = arith.addf %21, %20 : vector<8x128xf32>
    %c0_9 = arith.constant 0 : index
    %c0_10 = arith.constant 0 : index
    %23 = vector.load %arg4[%c0_9, %c0_10] : memref<8x128xf32, #tpu.memory_space<vmem>>, vector<8x128xf32>
    tpu.vector_store %arg4[%c0_9, %c0_10], %22 {strides = array<i32>} : memref<8x128xf32, #tpu.memory_space<vmem>>, vector<8x128xf32>,
    %c0_i32_11 = arith.constant 0 : i32
    %24 = arith.cmpi eq, %arg0, %c0_i32_11 : i32
    %25 = arith.extui %24 : i1 to i32
    %c0_i32_12 = arith.constant 0 : i32
    %26 = arith.cmpi ne, %25, %c0_i32_12 : i32
    scf.if %26 {
      %c0_13 = arith.constant 0 : index
      %c0_14 = arith.constant 0 : index
      %27 = vector.load %arg4[%c0_13, %c0_14] : memref<8x128xf32, #tpu.memory_space<vmem>>, vector<8x128xf32>
      %28 = vector.shape_cast %27 : vector<8x128xf32> to vector<1x8x128xf32>
      %cst_15 = arith.constant dense<0.000000e+00> : vector<1xf32>
      %29 = vector.multi_reduction <add>, %28, %cst_15 [1, 2] : vector<1x8x128xf32> to vector<1xf32>
      %30 = vector.shape_cast %29 : vector<1xf32> to vector<1x1x1xf32>
      %31 = vector.extract %30[0, 0, 0] : f32 from vector<1x1x1xf32>
      %32 = vector.broadcast %31 : f32 to vector<1x1xf32>
      %c0_16 = arith.constant 0 : index
      %c0_17 = arith.constant 0 : index
      %33 = vector.load %arg3[%c0_16, %c0_17] : memref<1x1xf32, #tpu.memory_space<vmem>>, vector<1x1xf32>
      tpu.vector_store %arg3[%c0_16, %c0_17], %32 {strides = array<i32>} : memref<1x1xf32, #tpu.memory_space<vmem>>, vector<1x1xf32>,
    } else {
    }
    return
  }
  func.func @transform_0(%arg0: i32) -> (i32, i32) {
    %c0_i32 = arith.constant 0 : i32
    %c0_i32_0 = arith.constant 0 : i32
    return %arg0, %c0_i32 : i32, i32
  }
  func.func @transform_1(%arg0: i32) -> (i32, i32) {
    %c0_i32 = arith.constant 0 : i32
    %c0_i32_0 = arith.constant 0 : i32
    return %arg0, %c0_i32 : i32, i32
  }
  func.func @transform_2(%arg0: i32) -> (i32, i32) {
    %c0_i32 = arith.constant 0 : i32
    %c0_i32_0 = arith.constant 0 : i32
    %c0_i32_1 = arith.constant 0 : i32
    return %c0_i32, %c0_i32_0 : i32, i32
  }
}

</mosaic_0001>

<llo_original>
// kernel: tpu_custom_call.1
$region0: #{tpu_custom_call.1}
  #allocation0 [shape = 'u32[]', space=smem, size = 0x4, offset = 0x4, fixed_abs, tag = 'smem constant byte address 0x4 - core index']
  #allocation1 [shape = 'u32[144,128]{1,0:T(1,128)}', space=vmem, size = 0x12000, scoped, tag = 'internal scratch']
  #allocation2 [shape = 'f32[8,128]{1,0:T(8,128)}', space=vmem, size = 0x1000, scoped, tag = 'scratch operand']
  %s0 = inlined_call_operand.hbm [shape: f32[16,128], index: 0, kind: input, shape index: {}]
  %s1 = inlined_call_operand.hbm [shape: f32[16,128], index: 1, kind: input, shape index: {}]
  %s2 = inlined_call_operand.hbm [shape: f32[1,1], index: 2, kind: output, shape index: {}]
  %s3 = sld [smem:[#allocation0]]
  $region34: #{tpu_custom_call.1} parent=0
    _
  %s5 = ssub.s32 1, %s3
  %s6 = scalar_select 0, %s5, %s3
  $region1: #{tpu_custom_call.1} parent=0
    #allocation3 [shape = 'u8[8192]{0}', space=vmem, size = 0x2000, scoped, tag = 'input window, operand 0, single buffered']
    #allocation4 [shape = 's32[1]{0}', space=sflag, size = 0x4, scoped, tag = 'scoped memory for tpu_custom_call.1']
    #allocation5 [shape = 's32[1]{0}', space=sflag, size = 0x4, scoped, tag = 'scoped memory for tpu_custom_call.1']
    #allocation6 [shape = 'u8[8192]{0}', space=vmem, size = 0x2000, scoped, tag = 'input window, operand 1, single buffered']
    #allocation7 [shape = 's32[1]{0}', space=sflag, size = 0x4, scoped, tag = 'scoped memory for tpu_custom_call.1']
    #allocation8 [shape = 'u8[512]{0}', space=vmem, size = 0x400, scoped, tag = 'output window, operand 0, single buffered']
    %7 = vsyncpa [#allocation4], 0
    %8 = vsyncpa [#allocation7], 0
    %9 = vsyncpa [#allocation5], 0
    // Predicated region
    $region2: #{tpu_custom_call.1} parent=1 // pred_check
      _
    $region3: #{tpu_custom_call.1} parent=1 // pred_check_branch
      %11 = sbr.rel (0) target = $region5
    $region4: #{tpu_custom_call.1} parent=1 // pred_region
      %s13 = ssub.s32 256, 256
      %14 = vsyncadd [#allocation4], %s13
      %s15 = sshll.u32 [#allocation3], 4
      %s16 = int_to_ptr.vmem [resolvable:$true] %s15
      %21 = dma.hbm_to_vmem [thread:$0]  %s0, 256, %s16, [#allocation4], 128, 128, 8
    $region5: #{tpu_custom_call.1} parent=1 // pred_fallthru
      _
    // Predicated region
    $region6: #{tpu_custom_call.1} parent=1 // pred_check
      _
    $region7: #{tpu_custom_call.1} parent=1 // pred_check_branch
      %23 = sbr.rel (0) target = $region9
    $region8: #{tpu_custom_call.1} parent=1 // pred_region
      %s25 = ssub.s32 256, 256
      %26 = vsyncadd [#allocation7], %s25
      %s27 = sshll.u32 [#allocation6], 4
      %s28 = int_to_ptr.vmem [resolvable:$true] %s27
      %33 = dma.hbm_to_vmem [thread:$0]  %s1, 256, %s28, [#allocation7], 128, 128, 8
    $region9: #{tpu_custom_call.1} parent=1 // pred_fallthru
      _
    // Predicated region
    $region10: #{tpu_custom_call.1} parent=1 // pred_check
      _
    $region11: #{tpu_custom_call.1} parent=1 // pred_check_branch
      %35 = sbr.rel (0) target = $region13
    $region12: #{tpu_custom_call.1} parent=1 // pred_region
      %36 = dma.done [#allocation4], 256
    $region13: #{tpu_custom_call.1} parent=1 // pred_fallthru
      _
    // Predicated region
    $region14: #{tpu_custom_call.1} parent=1 // pred_check
      _
    $region15: #{tpu_custom_call.1} parent=1 // pred_check_branch
      %38 = sbr.rel (0) target = $region17
    $region16: #{tpu_custom_call.1} parent=1 // pred_region
      %39 = dma.done [#allocation7], 256
    $region17: #{tpu_custom_call.1} parent=1 // pred_fallthru
      _
    %p40 = scmp.eq.s32.totalorder 0, 0
    // Predicated region
    $region18: #{tpu_custom_call.1} parent=1 // pred_check
      %p41 = pneg %p40
    $region19: #{tpu_custom_call.1} parent=1 // pred_check_branch
      %43 = sbr.rel (%p41) target = $region21
    $region20: #{tpu_custom_call.1} parent=1 // pred_region
      %44 = vst [vmem:[#allocation2] sm:$0xff] 0.0
    $region21: #{tpu_custom_call.1} parent=1 // pred_fallthru
      _
    %v45 = vld [vmem:[#allocation3] sm:$0xff]
    %v46 = vld [vmem:[#allocation3 + $0x8] sm:$0xff]
    %v47 = vld [vmem:[#allocation6] sm:$0xff]
    %v48 = vld [vmem:[#allocation6 + $0x8] sm:$0xff]
    %v49 = vlog2.pop %v45
    %v50 = vmul.f32 %v49, 0.6931472
    %v51 = vlog2.pop %v46
    %v52 = vmul.f32 %v51, 0.6931472
    %v53 = vmax.f32 %v50, -100.0
    %v54 = vmax.f32 %v52, -100.0
    %v55 = vsub.f32 1.0, %v45
    %v56 = vsub.f32 1.0, %v46
    %v57 = vlog2.pop %v55
    %v58 = vmul.f32 %v57, 0.6931472
    %v59 = vlog2.pop %v56
    %v60 = vmul.f32 %v59, 0.6931472
    %v61 = vmax.f32 %v58, -100.0
    %v62 = vmax.f32 %v60, -100.0
    %v63 = vsub.f32 %v53, %v61
    %v64 = vsub.f32 %v54, %v62
    %v65 = vmul.f32 %v47, %v63
    %v66 = vmul.f32 %v48, %v64
    %v67 = vadd.f32 %v61, %v65
    %v68 = vadd.f32 %v62, %v66
    %v69 = vsub.f32 0.0, %v67
    %v70 = vsub.f32 0.0, %v68
    %v71 = vadd.f32 %v69, %v70
    %v72 = vld [vmem:[#allocation2] sm:$0xff]
    %v73 = vadd.f32 %v72, %v71
    %74 = vst [vmem:[#allocation2] sm:$0xff] %v73
    // Predicated region
    $region22: #{tpu_custom_call.1} parent=1 // pred_check
      %p75 = pneg %p40
    $region23: #{tpu_custom_call.1} parent=1 // pred_check_branch
      %77 = sbr.rel (%p75) target = $region25
    $region24: #{tpu_custom_call.1} parent=1 // pred_region
      %v78 = vld [vmem:[#allocation2] sm:$0xff]
      %79 = vadd.xlane.f32.xlu0 %v78
      %v80 = vpop.xlane.xlu0 %79
      %v81 = vrot.slane %v80, 4
      %v82 = vadd.f32 %v80, %v81
      %v83 = vrot.slane %v82, 2
      %v84 = vadd.f32 %v82, %v83
      %v85 = vrot.slane %v84, 1
      %v86 = vadd.f32 %v84, %v85
      %s87 = vtos %v86
      %v88 = vstv %s87
      %vm89 = vcmask 0
      %90 = vst.msk [vmem:[#allocation8] sm:$0x1] %vm89, %v88
    $region25: #{tpu_custom_call.1} parent=1 // pred_fallthru
      _
    // Predicated region
    $region26: #{tpu_custom_call.1} parent=1 // pred_check
      _
    $region27: #{tpu_custom_call.1} parent=1 // pred_check_branch
      %92 = sbr.rel (0) target = $region29
    $region28: #{tpu_custom_call.1} parent=1 // pred_region
      %s94 = ssub.s32 16, 16
      %95 = vsyncadd [#allocation5], %s94
      %s97 = sshll.u32 [#allocation8], 4
      %s98 = int_to_ptr.vmem [resolvable:$true] %s97
      %100 = dma.vmem_to_hbm [thread:$0]  %s98, 16, %s2, [#allocation5]
    $region29: #{tpu_custom_call.1} parent=1 // pred_fallthru
      _
    // Predicated region
    $region30: #{tpu_custom_call.1} parent=1 // pred_check
      _
    $region31: #{tpu_custom_call.1} parent=1 // pred_check_branch
      %102 = sbr.rel (0) target = $region33
    $region32: #{tpu_custom_call.1} parent=1 // pred_region
      %103 = dma.done [#allocation5], 16
    $region33: #{tpu_custom_call.1} parent=1 // pred_fallthru
      _
    %104 = vsyncpa [#allocation4], 1
    %105 = vsyncpa [#allocation7], 1
    %106 = vsyncpa [#allocation5], 1

</llo_original>
